<compile_context>
chip_gen: v5e
topology: v5e:2x2
jax: 0.10.0
libtpu: 0.0.40
codegen_flags: <defaults>
</compile_context>

<pallas_src>
import numpy as np
import jax
import jax.numpy as jnp
from jax import lax
from jax.experimental import pallas as pl
from jax.experimental.pallas import tpu as pltpu


# ----------------------------- Pallas kernels -----------------------------

def squeeze_gate_kernel(fs_ref, c_ref, wbig_ref, b3_ref, wg_ref, bg_ref,
                        wb_ref, bb_ref, w2_ref, b2_ref, gate_ref):
    # fs_ref:   (B, Cin*S)       feat_small, flattened (native dtype)
    # c_ref:    (B, nz)          conditioning vectors
    # wbig_ref: (Cin*S, 4*Cout)  fused pool + im2col + 3x3-conv matrix, cols = (pos, cout)
    # b3_ref:   (1, 4*Cout)      conv3 bias tiled over the 4 positions
    # wg_ref/wb_ref: (nz, Cout)  AdaIN gamma/beta linear weights (transposed)
    # bg_ref/bb_ref: (1, Cout)
    # w2_ref:   (4*Cout, Cout)   2x2-conv weights, rows = (pos, cin)
    # b2_ref:   (1, Cout)
    # gate_ref: (B, Cout)        sigmoid gate, Cout lane-dense
    f32 = jnp.float32
    cout = gate_ref.shape[1]

    # AdaptiveAvgPool2d(4) + im2col + 3x3 valid conv fused into ONE matmul.
    y = jnp.dot(fs_ref[...], wbig_ref[...], preferred_element_type=f32) + b3_ref[...]
    # SiLU
    y = y * jax.nn.sigmoid(y)

    # split the 4 conv-output positions (contiguous lane groups of Cout)
    yp = [y[:, p * cout:(p + 1) * cout] for p in range(4)]

    # InstanceNorm2d over the 2x2 spatial positions (biased var, eps=1e-5, no affine)
    mean = 0.25 * (yp[0] + yp[1] + yp[2] + yp[3])
    dp = [q - mean for q in yp]
    var = 0.25 * (jnp.square(dp[0]) + jnp.square(dp[1])
                  + jnp.square(dp[2]) + jnp.square(dp[3]))
    inv = lax.rsqrt(var + 1e-5)

    # AdaIN: gamma/beta as whole-batch tiny matmuls, Cout on lanes
    cv = c_ref[...]
    gamma = jnp.dot(cv, wg_ref[...], preferred_element_type=f32) + bg_ref[...]
    beta = jnp.dot(cv, wb_ref[...], preferred_element_type=f32) + bb_ref[...]

    zp = [gamma * (d * inv) + beta for d in dp]
    z = jnp.concatenate(zp, axis=1)                     # (B, 4*Cout), (pos, cout) order

    # 2x2 valid conv on the 2x2 map -> (B, Cout), then sigmoid gate
    out = jnp.dot(z, w2_ref[...], preferred_element_type=f32) + b2_ref[...]
    gate_ref[...] = jax.nn.sigmoid(out).astype(gate_ref.dtype)


def excite_kernel(fb_ref, gate_ref, o_ref):
    # fb_ref: (TR, TP) lane-dense 2-D tile of feat_big; gate_ref: (TR, 1) f32
    o_ref[...] = (fb_ref[...] * gate_ref[...]).astype(o_ref.dtype)


# ----------------------------- wrapper helpers -----------------------------

def _adaptive_pool_matrix(H, W, out=4):
    # nn.AdaptiveAvgPool2d(out) region boundaries (general H, W) -> (H*W, out*out)
    def cdiv(a, b):
        return -(-a // b)
    Pm = np.zeros((H * W, out * out), np.float32)
    for qy in range(out):
        y0, y1 = (qy * H) // out, cdiv((qy + 1) * H, out)
        for qx in range(out):
            x0, x1 = (qx * W) // out, cdiv((qx + 1) * W, out)
            inv = 1.0 / ((y1 - y0) * (x1 - x0))
            for y in range(y0, y1):
                for x in range(x0, x1):
                    Pm[y * W + x, qy * out + qx] = inv
    return Pm


def _pick_lane_tile(P, cap=2048):
    # Largest multiple of 128 that divides P, capped at `cap` lanes.
    if P % 128:
        # TODO(synk): non-128-multiple spatial planes load the whole plane per block;
        # may exceed scoped VMEM for very large planes.
        return P
    best, m = 128, 128
    while m <= min(P, cap):
        if P % m == 0:
            best = m
        m += 128
    return best


def _pick_row_tile(R, TP, itemsize, target_bytes=1 << 20):
    # Largest multiple of 8 dividing R, sized so a block is ~<= 1 MiB
    # (double-buffered in+out stays well under the default scoped VMEM on all gens).
    if R % 8:
        return R
    cap = max(8, (target_bytes // max(TP * itemsize, 1)) // 8 * 8)
    best, m = 8, 8
    while m <= min(R, cap):
        if R % m == 0:
            best = m
        m += 8
    return best


def _excite(feat_big, gate_rows):
    # feat_big: (B, C, Hb, Wb); gate_rows: (B*C, 1) float32
    B, C, Hb, Wb = feat_big.shape
    P = Hb * Wb
    R = B * C
    itemsize = feat_big.dtype.itemsize

    TP = _pick_lane_tile(P)
    TR = _pick_row_tile(R, TP, itemsize)
    # keep >= 2 grid steps so v7x's two TensorCores both get work
    if (R // TR) * (P // TP) < 2:
        if TP % 256 == 0:
            TP //= 2
        elif TR % 16 == 0:
            TR //= 2

    fb2 = feat_big.reshape(R, P)
    out = pl.pallas_call(
        excite_kernel,
        out_shape=jax.ShapeDtypeStruct((R, P), feat_big.dtype),
        grid=(R // TR, P // TP),
        in_specs=[
            pl.BlockSpec((TR, TP), lambda r, t: (r, t)),
            pl.BlockSpec((TR, 1), lambda r, t: (r, 0)),
        ],
        out_specs=pl.BlockSpec((TR, TP), lambda r, t: (r, t)),
        compiler_params=pltpu.CompilerParams(
            dimension_semantics=("parallel", "parallel")),
    )(fb2, gate_rows)
    return out.reshape(B, C, Hb, Wb)


def se_block_cond(params, feat_small, feat_big, c, feature_injection=None):
    B, C, Hb, Wb = feat_big.shape

    if feature_injection is not None:
        # TODO(synk): only per-channel (B, C) / (B, C, 1, 1) injections handled here;
        # full-resolution spatial injection maps are not supported.
        gate = jax.nn.sigmoid(feature_injection.astype(jnp.float32)).reshape(B * C, 1)
        return _excite(feat_big, gate)

    _, Cin, Hs, Ws = feat_small.shape
    S = Hs * Ws
    nz = c.shape[1]
    Cout = params['w3'].shape[0]

    # Host-side fold of AdaptiveAvgPool2d(4) + im2col + 3x3-conv weights into one
    # (Cin*S, 4*Cout) matrix -> whole squeeze front-end is a single MXU matmul.
    # TODO(synk): for very large Cin*S*Cout, factor through the pooled 4x4 map
    # (pool matmul + conv matmul) instead of this fully-fused matrix.
    Pm = _adaptive_pool_matrix(Hs, Ws)                           # np (S, 16)
    idx = np.zeros((9, 4), np.int32)
    for ky in range(3):
        for kx in range(3):
            for oy in range(2):
                for ox in range(2):
                    idx[ky * 3 + kx, oy * 2 + ox] = (oy + ky) * 4 + (ox + kx)
    G3 = jnp.asarray(Pm[:, idx.reshape(-1)].reshape(S, 9, 4))    # (S, 9, 4)
    w3r = params['w3'].reshape(Cout, Cin, 9)
    Wbig = jnp.einsum('skp,ock->cspo', G3, w3r).reshape(Cin * S, 4 * Cout)
    b3row = jnp.tile(params['b3'], 4).reshape(1, 4 * Cout)

    w2r = params['w2'].reshape(Cout, Cout, 4)
    W2big = jnp.transpose(w2r, (2, 1, 0)).reshape(4 * Cout, Cout)
    b2row = params['b2'].reshape(1, Cout)

    # native dtype: no extra f32 copy of feat_small in HBM (accumulation is f32 in-kernel)
    fs2 = feat_small.reshape(B, Cin * S)

    # TODO(synk): for very large B or Cin*S the whole-batch VMEM block should be
    # tiled (batch grid axis / spatial "arbitrary" axis with accumulator).
    gate = pl.pallas_call(
        squeeze_gate_kernel,
        out_shape=jax.ShapeDtypeStruct((B, Cout), jnp.float32),
    )(fs2, c, Wbig, b3row,
      params['wg'].T, params['bg'].reshape(1, Cout),
      params['wb'].T, params['bb'].reshape(1, Cout),
      W2big, b2row)

    return _excite(feat_big, gate.reshape(B * Cout, 1))


# ----------------------------- params / reference -----------------------------

def spectral_sigma(w2d, key, n_iter=1, eps=1e-12):
    # One power iteration like torch spectral_norm's first forward pass.
    # TODO(synk): persistent u/v buffers across training steps (stateful) not modeled.
    u = jax.random.normal(key, (w2d.shape[0],), jnp.float32)
    u = u / jnp.maximum(jnp.linalg.norm(u), eps)
    v = None
    for _ in range(n_iter):
        v = w2d.T @ u
        v = v / jnp.maximum(jnp.linalg.norm(v), eps)
        u = w2d @ v
        u = u / jnp.maximum(jnp.linalg.norm(u), eps)
    return jnp.dot(u, w2d @ v)


def init_params(key, ch_in, ch_out, nz):
    he = lambda fan_in: (2.0 ** 0.5) * (fan_in ** -0.5)
    ks = jax.random.split(key, 8)

    def conv_param(kw, ku, cin, cout, ksz):
        w = jax.random.normal(kw, (cout, cin, ksz, ksz), jnp.float32) * he(cin * ksz * ksz)
        sigma = spectral_sigma(w.reshape(cout, -1), ku)
        return w / sigma, jnp.zeros((cout,), jnp.float32)

    def lin_param(kw, ku, cin, cout):
        w = jax.random.normal(kw, (cout, cin), jnp.float32) * he(cin)
        sigma = spectral_sigma(w, ku)
        return w / sigma, jnp.zeros((cout,), jnp.float32)

    p = {}
    p['w3'], p['b3'] = conv_param(ks[0], ks[1], ch_in, ch_out, 3)     # conv2d_3
    p['w2'], p['b2'] = conv_param(ks[2], ks[3], ch_out, ch_out, 2)    # conv2d_2
    p['wg'], p['bg'] = lin_param(ks[4], ks[5], nz, ch_out)            # gamma_fc
    p['wb'], p['bb'] = lin_param(ks[6], ks[7], nz, ch_out)            # beta_fc
    return p


def reference_forward(params, feat_small, feat_big, c):
    B, Cin, H, W = feat_small.shape
    # adaptive avg pool to 4x4 (H, W divisible by 4 in the demo)
    x = feat_small.reshape(B, Cin, 4, H // 4, 4, W // 4).mean(axis=(3, 5))

    def conv_valid(x, w, b):
        y = lax.conv_general_dilated(x, w, (1, 1), 'VALID',
                                     dimension_numbers=('NCHW', 'OIHW', 'NCHW'))
        return y + b[None, :, None, None]

    y = conv_valid(x, params['w3'], params['b3'])
    y = y * jax.nn.sigmoid(y)                               # SiLU
    mean = y.mean(axis=(2, 3), keepdims=True)
    var = ((y - mean) ** 2).mean(axis=(2, 3), keepdims=True)
    yn = (y - mean) * lax.rsqrt(var + 1e-5)
    gamma = c @ params['wg'].T + params['bg']
    beta = c @ params['wb'].T + params['bb']
    z = gamma[:, :, None, None] * yn + beta[:, :, None, None]
    o = conv_valid(z, params['w2'], params['b2'])
    return feat_big * jax.nn.sigmoid(o)


if __name__ == "__main__":
    ch_in, ch_out, nz = 4, 4, 8
    B, Hs, Ws = 2, 16, 16
    Hb, Wb = 32, 32

    key = jax.random.PRNGKey(0)
    kp, k1, k2, k3 = jax.random.split(key, 4)

    params = init_params(kp, ch_in, ch_out, nz)
    feat_small = jax.random.normal(k1, (B, ch_in, Hs, Ws), jnp.float32)
    feat_big = jax.random.normal(k2, (B, ch_out, Hb, Wb), jnp.float32)
    c = jax.random.normal(k3, (B, nz), jnp.float32)

    out = jax.jit(se_block_cond)(params, feat_small, feat_big, c)
    out = jax.block_until_ready(out)

    ref = jax.block_until_ready(reference_forward(params, feat_small, feat_big, c))
    assert out.shape == feat_big.shape, out.shape
    err = float(jnp.max(jnp.abs(out - ref)))
    assert jnp.allclose(out, ref, rtol=1e-2, atol=1e-2), err

    print("KERNEL_OK")
</pallas_src>

<mosaic_0001>
module attributes {stable_mosaic.version = 11 : i64} {
  func.func @squeeze_gate_kernel(%arg0: memref<2x1024xf32, #tpu.memory_space<vmem>>, %arg1: memref<2x8xf32, #tpu.memory_space<vmem>>, %arg2: memref<1024x16xf32, #tpu.memory_space<vmem>>, %arg3: memref<1x16xf32, #tpu.memory_space<vmem>>, %arg4: memref<8x4xf32, #tpu.memory_space<vmem>>, %arg5: memref<1x4xf32, #tpu.memory_space<vmem>>, %arg6: memref<8x4xf32, #tpu.memory_space<vmem>>, %arg7: memref<1x4xf32, #tpu.memory_space<vmem>>, %arg8: memref<16x4xf32, #tpu.memory_space<vmem>>, %arg9: memref<1x4xf32, #tpu.memory_space<vmem>>, %arg10: memref<2x4xf32, #tpu.memory_space<vmem>>) attributes {dimension_semantics = [], scalar_prefetch = 0 : i64, scratch_operands = 0 : i64, tpu.core_type = #tpu.core_type<tc>} {
    %c0 = arith.constant 0 : index
    %c0_0 = arith.constant 0 : index
    %0 = vector.load %arg0[%c0, %c0_0] : memref<2x1024xf32, #tpu.memory_space<vmem>>, vector<2x1024xf32>
    %c0_1 = arith.constant 0 : index
    %c0_2 = arith.constant 0 : index
    %1 = vector.load %arg2[%c0_1, %c0_2] : memref<1024x16xf32, #tpu.memory_space<vmem>>, vector<1024x16xf32>
    %cst = arith.constant dense<0.000000e+00> : vector<2x16xf32>
    %2 = tpu.matmul %0, %1, %cst {dimension_numbers = #tpu.dot_dimension_numbers<[1], [0], [0], [1], [0, 0, 1, 1], [], []>} : vector<2x1024xf32>, vector<1024x16xf32>, vector<2x16xf32> -> vector<2x16xf32>
    %c0_3 = arith.constant 0 : index
    %c0_4 = arith.constant 0 : index
    %3 = vector.load %arg3[%c0_3, %c0_4] : memref<1x16xf32, #tpu.memory_space<vmem>>, vector<1x16xf32>
    %4 = vector.broadcast %3 : vector<1x16xf32> to vector<2x16xf32>
    %5 = arith.addf %2, %4 : vector<2x16xf32>
    %6 = arith.negf %5 : vector<2x16xf32>
    %7 = math.exp %6 : vector<2x16xf32>
    %cst_5 = arith.constant 1.000000e+00 : f32
    %8 = vector.broadcast %cst_5 : f32 to vector<2x16xf32>
    %9 = arith.addf %8, %7 : vector<2x16xf32>
    %10 = arith.divf %8, %9 : vector<2x16xf32>
    %11 = arith.mulf %5, %10 : vector<2x16xf32>
    %12 = vector.extract_strided_slice %11 {offsets = [0, 0], sizes = [2, 4], strides = [1, 1]} : vector<2x16xf32> to vector<2x4xf32>
    %13 = vector.extract_strided_slice %11 {offsets = [0, 4], sizes = [2, 4], strides = [1, 1]} : vector<2x16xf32> to vector<2x4xf32>
    %14 = vector.extract_strided_slice %11 {offsets = [0, 8], sizes = [2, 4], strides = [1, 1]} : vector<2x16xf32> to vector<2x4xf32>
    %15 = vector.extract_strided_slice %11 {offsets = [0, 12], sizes = [2, 4], strides = [1, 1]} : vector<2x16xf32> to vector<2x4xf32>
    %16 = arith.addf %12, %13 : vector<2x4xf32>
    %17 = arith.addf %16, %14 : vector<2x4xf32>
    %18 = arith.addf %17, %15 : vector<2x4xf32>
    %cst_6 = arith.constant 2.500000e-01 : f32
    %19 = vector.broadcast %cst_6 : f32 to vector<2x4xf32>
    %20 = arith.mulf %19, %18 : vector<2x4xf32>
    %21 = arith.subf %12, %20 : vector<2x4xf32>
    %22 = arith.subf %13, %20 : vector<2x4xf32>
    %23 = arith.subf %14, %20 : vector<2x4xf32>
    %24 = arith.subf %15, %20 : vector<2x4xf32>
    %25 = arith.mulf %21, %21 : vector<2x4xf32>
    %26 = arith.mulf %22, %22 : vector<2x4xf32>
    %27 = arith.addf %25, %26 : vector<2x4xf32>
    %28 = arith.mulf %23, %23 : vector<2x4xf32>
    %29 = arith.addf %27, %28 : vector<2x4xf32>
    %30 = arith.mulf %24, %24 : vector<2x4xf32>
    %31 = arith.addf %29, %30 : vector<2x4xf32>
    %cst_7 = arith.constant 2.500000e-01 : f32
    %32 = vector.broadcast %cst_7 : f32 to vector<2x4xf32>
    %33 = arith.mulf %32, %31 : vector<2x4xf32>
    %cst_8 = arith.constant 9.99999974E-6 : f32
    %34 = vector.broadcast %cst_8 : f32 to vector<2x4xf32>
    %35 = arith.addf %33, %34 : vector<2x4xf32>
    %36 = math.rsqrt %35 : vector<2x4xf32>
    %c0_9 = arith.constant 0 : index
    %c0_10 = arith.constant 0 : index
    %37 = vector.load %arg1[%c0_9, %c0_10] : memref<2x8xf32, #tpu.memory_space<vmem>>, vector<2x8xf32>
    %c0_11 = arith.constant 0 : index
    %c0_12 = arith.constant 0 : index
    %38 = vector.load %arg4[%c0_11, %c0_12] : memref<8x4xf32, #tpu.memory_space<vmem>>, vector<8x4xf32>
    %cst_13 = arith.constant dense<0.000000e+00> : vector<2x4xf32>
    %39 = tpu.matmul %37, %38, %cst_13 {dimension_numbers = #tpu.dot_dimension_numbers<[1], [0], [0], [1], [0, 0, 1, 1], [], []>} : vector<2x8xf32>, vector<8x4xf32>, vector<2x4xf32> -> vector<2x4xf32>
    %c0_14 = arith.constant 0 : index
    %c0_15 = arith.constant 0 : index
    %40 = vector.load %arg5[%c0_14, %c0_15] : memref<1x4xf32, #tpu.memory_space<vmem>>, vector<1x4xf32>
    %41 = vector.broadcast %40 : vector<1x4xf32> to vector<2x4xf32>
    %42 = arith.addf %39, %41 : vector<2x4xf32>
    %c0_16 = arith.constant 0 : index
    %c0_17 = arith.constant 0 : index
    %43 = vector.load %arg6[%c0_16, %c0_17] : memref<8x4xf32, #tpu.memory_space<vmem>>, vector<8x4xf32>
    %cst_18 = arith.constant dense<0.000000e+00> : vector<2x4xf32>
    %44 = tpu.matmul %37, %43, %cst_18 {dimension_numbers = #tpu.dot_dimension_numbers<[1], [0], [0], [1], [0, 0, 1, 1], [], []>} : vector<2x8xf32>, vector<8x4xf32>, vector<2x4xf32> -> vector<2x4xf32>
    %c0_19 = arith.constant 0 : index
    %c0_20 = arith.constant 0 : index
    %45 = vector.load %arg7[%c0_19, %c0_20] : memref<1x4xf32, #tpu.memory_space<vmem>>, vector<1x4xf32>
    %46 = vector.broadcast %45 : vector<1x4xf32> to vector<2x4xf32>
    %47 = arith.addf %44, %46 : vector<2x4xf32>
    %48 = arith.mulf %21, %36 : vector<2x4xf32>
    %49 = arith.mulf %42, %48 : vector<2x4xf32>
    %50 = arith.addf %49, %47 : vector<2x4xf32>
    %51 = arith.mulf %22, %36 : vector<2x4xf32>
    %52 = arith.mulf %42, %51 : vector<2x4xf32>
    %53 = arith.addf %52, %47 : vector<2x4xf32>
    %54 = arith.mulf %23, %36 : vector<2x4xf32>
    %55 = arith.mulf %42, %54 : vector<2x4xf32>
    %56 = arith.addf %55, %47 : vector<2x4xf32>
    %57 = arith.mulf %24, %36 : vector<2x4xf32>
    %58 = arith.mulf %42, %57 : vector<2x4xf32>
    %59 = arith.addf %58, %47 : vector<2x4xf32>
    %60 = tpu.concatenate %50, %53, %56, %59 in 1 : vector<2x4xf32>, vector<2x4xf32>, vector<2x4xf32>, vector<2x4xf32> -> vector<2x16xf32>
    %c0_21 = arith.constant 0 : index
    %c0_22 = arith.constant 0 : index
    %61 = vector.load %arg8[%c0_21, %c0_22] : memref<16x4xf32, #tpu.memory_space<vmem>>, vector<16x4xf32>
    %cst_23 = arith.constant dense<0.000000e+00> : vector<2x4xf32>
    %62 = tpu.matmul %60, %61, %cst_23 {dimension_numbers = #tpu.dot_dimension_numbers<[1], [0], [0], [1], [0, 0, 1, 1], [], []>} : vector<2x16xf32>, vector<16x4xf32>, vector<2x4xf32> -> vector<2x4xf32>
    %c0_24 = arith.constant 0 : index
    %c0_25 = arith.constant 0 : index
    %63 = vector.load %arg9[%c0_24, %c0_25] : memref<1x4xf32, #tpu.memory_space<vmem>>, vector<1x4xf32>
    %64 = vector.broadcast %63 : vector<1x4xf32> to vector<2x4xf32>
    %65 = arith.addf %62, %64 : vector<2x4xf32>
    %66 = arith.negf %65 : vector<2x4xf32>
    %67 = math.exp %66 : vector<2x4xf32>
    %cst_26 = arith.constant 1.000000e+00 : f32
    %68 = vector.broadcast %cst_26 : f32 to vector<2x4xf32>
    %69 = arith.addf %68, %67 : vector<2x4xf32>
    %70 = arith.divf %68, %69 : vector<2x4xf32>
    %c0_27 = arith.constant 0 : index
    %c0_28 = arith.constant 0 : index
    %71 = vector.load %arg10[%c0_27, %c0_28] : memref<2x4xf32, #tpu.memory_space<vmem>>, vector<2x4xf32>
    tpu.vector_store %arg10[%c0_27, %c0_28], %70 {strides = array<i32>} : memref<2x4xf32, #tpu.memory_space<vmem>>, vector<2x4xf32>,
    return
  }
}

module attributes {stable_mosaic.version = 11 : i64} {
  func.func @excite_kernel(%arg0: i32, %arg1: i32, %arg2: memref<8x512xf32, #tpu.memory_space<vmem>>, %arg3: memref<8x1xf32, #tpu.memory_space<vmem>>, %arg4: memref<8x512xf32, #tpu.memory_space<vmem>>) attributes {dimension_semantics = [#tpu.dimension_semantics<parallel>, #tpu.dimension_semantics<parallel>], iteration_bounds = array<i64: 1, 2>, scalar_prefetch = 0 : i64, scratch_operands = 0 : i64, tpu.core_type = #tpu.core_type<tc>, window_params = [{transform_indices = @transform_0, window_bounds = array<i64: 8, 512>}, {transform_indices = @transform_1, window_bounds = array<i64: 8, 1>}, {transform_indices = @transform_2, window_bounds = array<i64: 8, 512>}]} {
    %c0 = arith.constant 0 : index
    %c0_0 = arith.constant 0 : index
    %0 = vector.load %arg2[%c0, %c0_0] : memref<8x512xf32, #tpu.memory_space<vmem>>, vector<8x512xf32>
    %c0_1 = arith.constant 0 : index
    %c0_2 = arith.constant 0 : index
    %1 = vector.load %arg3[%c0_1, %c0_2] : memref<8x1xf32, #tpu.memory_space<vmem>>, vector<8x1xf32>
    %2 = vector.broadcast %1 : vector<8x1xf32> to vector<8x512xf32>
    %3 = arith.mulf %0, %2 : vector<8x512xf32>
    %c0_3 = arith.constant 0 : index
    %c0_4 = arith.constant 0 : index
    %4 = vector.load %arg4[%c0_3, %c0_4] : memref<8x512xf32, #tpu.memory_space<vmem>>, vector<8x512xf32>
    tpu.vector_store %arg4[%c0_3, %c0_4], %3 {strides = array<i32>} : memref<8x512xf32, #tpu.memory_space<vmem>>, vector<8x512xf32>,
    return
  }
  func.func @transform_0(%arg0: i32, %arg1: i32) -> (i32, i32) {
    %c0_i32 = arith.constant 0 : i32
    return %arg0, %arg1 : i32, i32
  }
  func.func @transform_1(%arg0: i32, %arg1: i32) -> (i32, i32) {
    %c0_i32 = arith.constant 0 : i32
    %c0_i32_0 = arith.constant 0 : i32
    return %arg0, %c0_i32 : i32, i32
  }
  func.func @transform_2(%arg0: i32, %arg1: i32) -> (i32, i32) {
    %c0_i32 = arith.constant 0 : i32
    return %arg0, %arg1 : i32, i32
  }
}

</mosaic_0001>

<llo_original>
// kernel: tile.8
$region0: #{tile.8}
  #allocation0 [shape = 's32[1]{0}', space=sflag, size = 0x4, scoped, tag = 'scoped memory for tile.8']
  %s0 = inlined_call_operand.vmem [shape: f32[4], index: 0, kind: input, shape index: {}]
  %s1 = inlined_call_operand.vmem [shape: f32[4,4], index: 1, kind: output, shape index: {}]
  // Predicated region
  $region2: #{tile.8} parent=0 // pred_check
    _
  $region3: #{tile.8} parent=0 // pred_check_branch
    %3 = sbr.rel (0) target = $region5
  $region4: #{tile.8} parent=0 // pred_region
    _
  $region5: #{tile.8} parent=0 // pred_fallthru
    _
  %v4 = vld [vmem:[%s0] ss:$0 sm:$0xff]
  %5 = vst [vmem:[%s1] sm:$0xf] %v4

// kernel: tile.9
$region0: #{tile.9}
  %s0 = inlined_call_operand.vmem [shape: f32[4,4], index: 0, kind: input, shape index: {}]
  %s1 = inlined_call_operand.vmem [shape: f32[1,16], index: 1, kind: output, shape index: {}]
  $region1: #{tile.9} parent=0
    #allocation0 [shape = 'u8[4096]{0}', space=vmem, size = 0x1000, scoped, tag = 'scoped mem for output reshape']
    #allocation1 [shape = 'u8[4096]{0}', space=vmem, size = 0x1000, scoped, tag = 'scoped mem for input reshape']
    %s3 = ssub.s32 16, 1
    %v4 = vld [vmem:[%s0] sm:%s3]
    %5 = vst [vmem:[#allocation1] sm:%s3] %v4
    %v6 = vld [vmem:[#allocation1] sm:$0x1]
    %vm7 = vcmask 31744
    %8 = vst.msk [vmem:[#allocation0] sm:$0x1] %vm7, %v6
    %s9 = scalar_lea.vmem [#allocation1], 3
    %v10 = vld [vmem:[%s9] sm:$0x1]
    %11 = vrot.lane.b32.xlu0 %v10, 12
    %v12 = vpop.permute.xlu0 %11
    %vm13 = vcmask 130144
    %14 = vst.msk [vmem:[#allocation0] sm:$0x1] %vm13, %v12
    %s15 = scalar_lea.vmem [#allocation1], 2
    %v16 = vld [vmem:[%s15] sm:$0x1]
    %17 = vrot.lane.b32.xlu0 %v16, 8
    %v18 = vpop.permute.xlu0 %17
    %vm19 = vcmask 97344
    %20 = vst.msk [vmem:[#allocation0] sm:$0x1] %vm19, %v18
    %s21 = scalar_lea.vmem [#allocation1], 1
    %v22 = vld [vmem:[%s21] sm:$0x1]
    %23 = vrot.lane.b32.xlu0 %v22, 4
    %v24 = vpop.permute.xlu0 %23
    %vm25 = vcmask 64544
    %26 = vst.msk [vmem:[#allocation0] sm:$0x1] %vm25, %v24
    %s28 = ssub.s32 2, 1
    %v29 = vld [vmem:[#allocation0] sm:%s28]
    %s31 = ssub.s32 2, 1
    %32 = vst [vmem:[%s1] sm:%s31] %v29

// kernel: se_block_cond.3
$region0: #{se_block_cond.3}
  #allocation0 [shape = 'u32[]', space=smem, size = 0x4, offset = 0x4, fixed_abs, tag = 'smem constant byte address 0x4 - core index']
  #allocation1 [shape = 'u32[72,128]{1,0:T(1,128)}', space=vmem, size = 0x9000, scoped, tag = 'internal scratch']
  %s0 = inlined_call_operand.vmem [shape: f32[8,1024], index: 0, kind: input, shape index: {}]
  %s1 = inlined_call_operand.vmem [shape: f32[8,1], index: 1, kind: input, shape index: {}]
  %s2 = inlined_call_operand.vmem [shape: f32[8,1024], index: 2, kind: output, shape index: {}]
  %s3 = sld [smem:[#allocation0]]
  $region41: #{se_block_cond.3} parent=0
    _
  %s5 = ssub.s32 1, %s3
  %s6 = scalar_select 0, %s5, %s3
  loop: start=0, step=1, limit=4
  $region2: #{se_block_cond.3} parent=0 // loop_pre_header
    _
  $region3: #{se_block_cond.3} parent=0 // loop_header
    %s8 = sphi 0, %s12
    %p9 = scmp.ge.s32.totalorder %s8, 4
    %s15 = sphi 0, %s27
    %s16 = sphi 0, %s23
    %s17 = sphi 0, %s15
    %s18 = sphi 0, %s16
    %s19 = sphi 0, %s17
    %s20 = sphi 0, %s18
    %s32 = sphi 0, %s34
    %s35 = sphi 0, %s32
    %s36 = sphi 0, %s35
    %s52 = sphi 0, %s36
    %s58 = sphi 0, %s60
    %s61 = sphi 0, %s58
    %s62 = sphi 0, %s61
    %s78 = sphi 0, %s62
    %s86 = sphi 0, %s88
    %s89 = sphi 0, %s86
    %s90 = sphi 0, %s89
    %s106 = sphi 0, %s90
  $region4: #{se_block_cond.3} parent=0 // loop_header_branch
    %11 = sbr.rel (%p9) target = $region8
  $region5: #{se_block_cond.3} parent=0 // loop_body
    %s13 = ssub.s32 %s8, 1
    %s14 = ssub.s32 %s8, 2
    %s21 = sadd.s32 1, %s16
    %p22 = scmp.ge.s32.totalorder %s21, 2
    %s23 = scalar_select %p22, 0, %s21
    %s24 = sadd.s32 1, %s15
    %s25 = scalar_select %p22, %s24, %s15
    %p26 = scmp.ge.s32.totalorder %s25, 1
    %s27 = scalar_select %p26, 0, %s25
    %s28 = ssub.s32 %s15, %s27
    %s29 = ssub.s32 %s16, %s23
    %s30 = sor.u32 %s28, %s29
    %p31 = scmp.eq.s32.totalorder %s30, 0
    %s33 = sadd.s32 %s32, 1
    %s34 = scalar_select %p31, %s32, %s33
    %p37 = pneg %p31
    %p38 = scmp.eq.s32.totalorder %s8, 1
    %p39 = por %p37, %p38
    %p40 = scmp.ne.s32.totalorder %s32, %s35
    %p41 = scmp.eq.s32.totalorder %s8, 0
    %p42 = por %p40, %p41
    %p43 = scmp.ne.s32.totalorder %s32, %s35
    %p44 = scmp.eq.s32.totalorder %s13, 1
    %p45 = por %p43, %p44
    %p46 = scmp.ne.s32.totalorder %s35, %s36
    %p47 = scmp.eq.s32.totalorder %s13, 0
    %p48 = por %p46, %p47
    %p49 = scmp.ne.s32.totalorder %s35, %s36
    %p50 = scmp.eq.s32.totalorder %s14, 1
    %p51 = por %p49, %p50
    %p53 = scmp.ne.s32.totalorder %s36, %s52
    %p54 = scmp.eq.s32.totalorder %s14, 0
    %p55 = por %p53, %p54
    %s56 = ssub.s32 %s15, %s27
    %p57 = scmp.eq.s32.totalorder %s56, 0
    %s59 = sadd.s32 %s58, 1
    %s60 = scalar_select %p57, %s58, %s59
    %p63 = pneg %p57
    %p64 = scmp.eq.s32.totalorder %s8, 1
    %p65 = por %p63, %p64
    %p66 = scmp.ne.s32.totalorder %s58, %s61
    %p67 = scmp.eq.s32.totalorder %s8, 0
    %p68 = por %p66, %p67
    %p69 = scmp.ne.s32.totalorder %s58, %s61
    %p70 = scmp.eq.s32.totalorder %s13, 1
    %p71 = por %p69, %p70
    %p72 = scmp.ne.s32.totalorder %s61, %s62
    %p73 = scmp.eq.s32.totalorder %s13, 0
    %p74 = por %p72, %p73
    %p75 = scmp.ne.s32.totalorder %s61, %s62
    %p76 = scmp.eq.s32.totalorder %s14, 1
    %p77 = por %p75, %p76
    %p79 = scmp.ne.s32.totalorder %s62, %s78
    %p80 = scmp.eq.s32.totalorder %s14, 0
    %p81 = por %p79, %p80
    %s82 = ssub.s32 %s15, %s27
    %s83 = ssub.s32 %s16, %s23
    %s84 = sor.u32 %s82, %s83
    %p85 = scmp.eq.s32.totalorder %s84, 0
    %s87 = sadd.s32 %s86, 1
    %s88 = scalar_select %p85, %s86, %s87
    %p91 = pneg %p85
    %p92 = scmp.eq.s32.totalorder %s8, 1
    %p93 = por %p91, %p92
    %p94 = scmp.ne.s32.totalorder %s86, %s89
    %p95 = scmp.eq.s32.totalorder %s8, 0
    %p96 = por %p94, %p95
    %p97 = scmp.ne.s32.totalorder %s86, %s89
    %p98 = scmp.eq.s32.totalorder %s13, 1
    %p99 = por %p97, %p98
    %p100 = scmp.ne.s32.totalorder %s89, %s90
    %p101 = scmp.eq.s32.totalorder %s13, 0
    %p102 = por %p100, %p101
    %p103 = scmp.ne.s32.totalorder %s89, %s90
    %p104 = scmp.eq.s32.totalorder %s14, 1
    %p105 = por %p103, %p104
    %p107 = scmp.ne.s32.totalorder %s90, %s106
    %p108 = scmp.eq.s32.totalorder %s14, 0
    %p109 = por %p107, %p108
    %p110 = scmp.le.s32.totalorder 1, %s8
    %p111 = scmp.lt.s32.totalorder %s8, 3
    %p112 = pnand %p110, %p111
    %p113 = pneg %p112
    // Predicated region
    $region9: #{se_block_cond.3} parent=5 // pred_check
      _
    $region10: #{se_block_cond.3} parent=5 // pred_check_branch
      %115 = sbr.rel (%p112) target = $region12
    $region11: #{se_block_cond.3} parent=5 // pred_region
      %s116 = ssub.s32 %s8, 1
      // Predicated region
      $region13: #{se_block_cond.3} parent=11 // pred_check
        %p117 = pneg %p74
      $region14: #{se_block_cond.3} parent=11 // pred_check_branch
        %119 = sbr.rel (%p117) target = $region16
      $region15: #{se_block_cond.3} parent=11 // pred_region
        %p120 = scmp.lt.s32.totalorder %s17, 0
        %s121 = scalar_select %p120, %s17, 0
        %s122 = smul.addr %s121, 8
        %s123 = scalar_lea.vmem %s1, %s122
      $region16: #{se_block_cond.3} parent=11 // pred_fallthru
        _
    $region12: #{se_block_cond.3} parent=5 // pred_fallthru
      _
    %p124 = scmp.lt.s32.totalorder %s8, 2
    // Predicated region
    $region17: #{se_block_cond.3} parent=5 // pred_check
      %p125 = pneg %p124
    $region18: #{se_block_cond.3} parent=5 // pred_check_branch
      %127 = sbr.rel (%p125) target = $region20
    $region19: #{se_block_cond.3} parent=5 // pred_region
      // Predicated region
      $region21: #{se_block_cond.3} parent=19 // pred_check
        %p128 = pneg %p42
      $region22: #{se_block_cond.3} parent=19 // pred_check_branch
        %130 = sbr.rel (%p128) target = $region24
      $region23: #{se_block_cond.3} parent=19 // pred_region
        %s131 = smul.u32 4, %s16
        %p132 = scmp.lt.s32.totalorder %s15, 0
        %s133 = scalar_select %p132, %s15, 0
        %p134 = scmp.lt.s32.totalorder %s131, 7
        %s135 = scalar_select %p134, %s131, 7
        %s136 = smul.addr %s133, 8
        %s137 = sadd.s32 %s135, %s136
        %s138 = smul.addr %s137, 8
        %s139 = scalar_lea.vmem %s0, %s138
        %s140 = smul.u32 4, %s16
      $region24: #{se_block_cond.3} parent=19 // pred_fallthru
        _
    $region20: #{se_block_cond.3} parent=5 // pred_fallthru
      _
    %p141 = scmp.le.s32.totalorder 1, %s8
    %p142 = scmp.lt.s32.totalorder %s8, 3
    %p143 = pnand %p141, %p142
    %p144 = pneg %p143
    // Predicated region
    $region25: #{se_block_cond.3} parent=5 // pred_check
      _
    $region26: #{se_block_cond.3} parent=5 // pred_check_branch
      %146 = sbr.rel (%p143) target = $region28
    $region27: #{se_block_cond.3} parent=5 // pred_region
      %s147 = ssub.s32 %s8, 1
      %s148 = smul.u32 4, %s18
      %p149 = scmp.lt.s32.totalorder %s17, 0
      %s150 = scalar_select %p149, %s17, 0
      %p151 = scmp.lt.s32.totalorder %s148, 7
      %s152 = scalar_select %p151, %s148, 7
      %s153 = smul.addr %s150, 8
      %s154 = sadd.s32 %s152, %s153
      %s155 = smul.addr %s154, 8
      %s156 = scalar_lea.vmem %s0, %s155
      %p157 = pneg %p48
      %p158 = pneg %p45
      %p159 = scmp.lt.s32.totalorder %s17, 0
      %s160 = scalar_select %p159, %s17, 0
      %s161 = smul.addr %s160, 8
      %s162 = scalar_lea.vmem %s1, %s161
      %p163 = pneg %p74
      %p164 = pneg %p71
      %p165 = pneg %p102
      %p166 = pneg %p99
      %s167 = smul.u32 4, %s18
      %p168 = scmp.lt.s32.totalorder %s17, 0
      %s169 = scalar_select %p168, %s17, 0
      %p170 = scmp.lt.s32.totalorder %s167, 7
      %s171 = scalar_select %p170, %s167, 7
      %s172 = smul.addr %s169, 8
      %s173 = sadd.s32 %s171, %s172
      %s174 = smul.addr %s173, 8
      %s175 = scalar_lea.vmem %s2, %s174
      %s176 = smul.u32 4, %s18
      %p177 = scmp.lt.s32.totalorder %s17, 0
      %s178 = scalar_select %p177, %s17, 0
      %p179 = scmp.lt.s32.totalorder %s176, 7
      %s180 = scalar_select %p179, %s176, 7
      %s181 = smul.addr %s178, 8
      %s182 = sadd.s32 %s180, %s181
      %s183 = smul.addr %s182, 8
      %s184 = scalar_lea.vmem %s0, %s183
      %s185 = smul.u32 4, %s18
      %p186 = scmp.lt.s32.totalorder %s17, 0
      %s187 = scalar_select %p186, %s17, 0
      %s188 = smul.addr %s187, 8
      %s189 = scalar_lea.vmem %s1, %s188
      %s190 = smul.u32 4, %s18
      %p191 = scmp.lt.s32.totalorder %s17, 0
      %s192 = scalar_select %p191, %s17, 0
      %p193 = scmp.lt.s32.totalorder %s190, 7
      %s194 = scalar_select %p193, %s190, 7
      %s195 = smul.addr %s192, 8
      %s196 = sadd.s32 %s194, %s195
      %s197 = smul.addr %s196, 8
      %s198 = scalar_lea.vmem %s2, %s197
      %s199 = smul.u32 4, %s18
      %v200 = vld [vmem:[%s184] sm:$0xff]
      %v201 = vld [vmem:[%s184 + $0x8] sm:$0xff]
      %v202 = vld [vmem:[%s184 + $0x10] sm:$0xff]
      %v203 = vld [vmem:[%s184 + $0x18] sm:$0xff]
      %v204 = vld [vmem:[%s189] sm:$0xff]
      %206 = vset.pattern.permute.xlu0 0
      %207 = vperm.xlu0 %206, %v204
      %v208 = vpop.permute.xlu0 %207
      %v210 = vmul.f32 %v200, %v208
      %v211 = vmul.f32 %v201, %v208
      %v212 = vmul.f32 %v202, %v208
      %v213 = vmul.f32 %v203, %v208
      %214 = vst [vmem:[%s198] sm:$0xff] %v210
      %215 = vst [vmem:[%s198 + $0x8] sm:$0xff] %v211
      %216 = vst [vmem:[%s198 + $0x10] sm:$0xff] %v212
      %217 = vst [vmem:[%s198 + $0x18] sm:$0xff] %v213
      %s218 = smul.u32 4, %s18
      %p219 = scmp.lt.s32.totalorder %s17, 0
      %s220 = scalar_select %p219, %s17, 0
      %p221 = scmp.lt.s32.totalorder %s218, 7
      %s222 = scalar_select %p221, %s218, 7
      %s223 = smul.addr %s220, 8
      %s224 = sadd.s32 %s222, %s223
      %s225 = smul.addr %s224, 8
      %s226 = scalar_lea.vmem %s2, %s225
      // Predicated region
      $region29: #{se_block_cond.3} parent=27 // pred_check
        %p227 = pneg %p99
      $region30: #{se_block_cond.3} parent=27 // pred_check_branch
        %229 = sbr.rel (%p227) target = $region32
      $region31: #{se_block_cond.3} parent=27 // pred_region
        %s230 = smul.u32 4, %s18
      $region32: #{se_block_cond.3} parent=27 // pred_fallthru
        _
    $region28: #{se_block_cond.3} parent=5 // pred_fallthru
      _
    %p231 = scmp.le.s32.totalorder 2, %s8
    // Predicated region
    $region33: #{se_block_cond.3} parent=5 // pred_check
      %p232 = pneg %p231
    $region34: #{se_block_cond.3} parent=5 // pred_check_branch
      %234 = sbr.rel (%p232) target = $region36
    $region35: #{se_block_cond.3} parent=5 // pred_region
      %s235 = ssub.s32 %s8, 2
      // Predicated region
      $region37: #{se_block_cond.3} parent=35 // pred_check
        %p236 = pneg %p105
      $region38: #{se_block_cond.3} parent=35 // pred_check_branch
        %238 = sbr.rel (%p236) target = $region40
      $region39: #{se_block_cond.3} parent=35 // pred_region
        %s239 = smul.u32 4, %s20
        %p240 = scmp.lt.s32.totalorder %s19, 0
        %s241 = scalar_select %p240, %s19, 0
        %p242 = scmp.lt.s32.totalorder %s239, 7
        %s243 = scalar_select %p242, %s239, 7
        %s244 = smul.addr %s241, 8
        %s245 = sadd.s32 %s243, %s244
        %s246 = smul.addr %s245, 8
        %s247 = scalar_lea.vmem %s2, %s246
      $region40: #{se_block_cond.3} parent=35 // pred_fallthru
        _
    $region36: #{se_block_cond.3} parent=5 // pred_fallthru
      _
  $region6: #{se_block_cond.3} parent=0 // loop_footer
    %s12 = sadd.s32 1, %s8
  $region7: #{se_block_cond.3} parent=0 // loop_footer_branch
    %7 = sbr.rel target = $region3
  $region8: #{se_block_cond.3} parent=0 // loop_exit
    _

// kernel: se_block_cond.2
$region0: #{se_block_cond.2}
  #allocation0 [shape = 'u32[]', space=smem, size = 0x4, offset = 0x4, fixed_abs, tag = 'smem constant byte address 0x4 - core index']
  #allocation1 [shape = 'u32[72,128]{1,0:T(1,128)}', space=vmem, size = 0x9000, scoped, tag = 'internal scratch']
  %s0 = inlined_call_operand.vmem [shape: f32[2,1024], index: 0, kind: input, shape index: {}]
  %s1 = inlined_call_operand.vmem [shape: f32[2,8], index: 1, kind: input, shape index: {}]
  %s2 = inlined_call_operand.vmem [shape: f32[1024,16], index: 2, kind: input, shape index: {}]
  %s3 = inlined_call_operand.vmem [shape: f32[1,16], index: 3, kind: input, shape index: {}]
  %s4 = inlined_call_operand.vmem [shape: f32[8,4], index: 4, kind: input, shape index: {}]
  %s5 = inlined_call_operand.vmem [shape: f32[1,4], index: 5, kind: input, shape index: {}]
  %s6 = inlined_call_operand.vmem [shape: f32[8,4], index: 6, kind: input, shape index: {}]
  %s7 = inlined_call_operand.vmem [shape: f32[1,4], index: 7, kind: input, shape index: {}]
  %s8 = inlined_call_operand.vmem [shape: f32[16,4], index: 8, kind: input, shape index: {}]
  %s9 = inlined_call_operand.vmem [shape: f32[1,4], index: 9, kind: input, shape index: {}]
  %s10 = inlined_call_operand.vmem [shape: f32[2,4], index: 10, kind: output, shape index: {}]
  %s11 = sld [smem:[#allocation0]]
  $region50: #{se_block_cond.2} parent=0
    _
  %s13 = ssub.s32 1, %s11
  %s14 = scalar_select 0, %s13, %s11
  // Predicated region
  $region2: #{se_block_cond.2} parent=0 // pred_check
    _
  $region3: #{se_block_cond.2} parent=0 // pred_check_branch
    %16 = sbr.rel (0) target = $region5
  $region4: #{se_block_cond.2} parent=0 // pred_region
    _
  $region5: #{se_block_cond.2} parent=0 // pred_fallthru
    _
  // Predicated region
  $region6: #{se_block_cond.2} parent=0 // pred_check
    _
  $region7: #{se_block_cond.2} parent=0 // pred_check_branch
    %18 = sbr.rel (0) target = $region9
  $region8: #{se_block_cond.2} parent=0 // pred_region
    _
  $region9: #{se_block_cond.2} parent=0 // pred_fallthru
    _
  // Predicated region
  $region10: #{se_block_cond.2} parent=0 // pred_check
    _
  $region11: #{se_block_cond.2} parent=0 // pred_check_branch
    %20 = sbr.rel (0) target = $region13
  $region12: #{se_block_cond.2} parent=0 // pred_region
    _
  $region13: #{se_block_cond.2} parent=0 // pred_fallthru
    _
  // Predicated region
  $region14: #{se_block_cond.2} parent=0 // pred_check
    _
  $region15: #{se_block_cond.2} parent=0 // pred_check_branch
    %22 = sbr.rel (0) target = $region17
  $region16: #{se_block_cond.2} parent=0 // pred_region
    _
  $region17: #{se_block_cond.2} parent=0 // pred_fallthru
    _
  // Predicated region
  $region18: #{se_block_cond.2} parent=0 // pred_check
    _
  $region19: #{se_block_cond.2} parent=0 // pred_check_branch
    %24 = sbr.rel (0) target = $region21
  $region20: #{se_block_cond.2} parent=0 // pred_region
    _
  $region21: #{se_block_cond.2} parent=0 // pred_fallthru
    _
  // Predicated region
  $region22: #{se_block_cond.2} parent=0 // pred_check
    _
  $region23: #{se_block_cond.2} parent=0 // pred_check_branch
    %26 = sbr.rel (0) target = $region25
  $region24: #{se_block_cond.2} parent=0 // pred_region
    _
  $region25: #{se_block_cond.2} parent=0 // pred_fallthru
    _
  // Predicated region
  $region26: #{se_block_cond.2} parent=0 // pred_check
    _
  $region27: #{se_block_cond.2} parent=0 // pred_check_branch
    %28 = sbr.rel (0) target = $region29
  $region28: #{se_block_cond.2} parent=0 // pred_region
    _
  $region29: #{se_block_cond.2} parent=0 // pred_fallthru
    _
  // Predicated region
  $region30: #{se_block_cond.2} parent=0 // pred_check
    _
  $region31: #{se_block_cond.2} parent=0 // pred_check_branch
    %30 = sbr.rel (0) target = $region33
  $region32: #{se_block_cond.2} parent=0 // pred_region
    _
  $region33: #{se_block_cond.2} parent=0 // pred_fallthru
    _
  // Predicated region
  $region34: #{se_block_cond.2} parent=0 // pred_check
    _
  $region35: #{se_block_cond.2} parent=0 // pred_check_branch
    %32 = sbr.rel (0) target = $region37
  $region36: #{se_block_cond.2} parent=0 // pred_region
    _
  $region37: #{se_block_cond.2} parent=0 // pred_fallthru
    _
  // Predicated region
  $region38: #{se_block_cond.2} parent=0 // pred_check
    _
  $region39: #{se_block_cond.2} parent=0 // pred_check_branch
    %34 = sbr.rel (0) target = $region41
  $region40: #{se_block_cond.2} parent=0 // pred_region
    _
  $region41: #{se_block_cond.2} parent=0 // pred_fallthru
    _
  %v35 = vld [vmem:[%s0] sm:$0xff]
  %v36 = vld [vmem:[%s0 + $0x8] sm:$0xff]
  %v37 = vld [vmem:[%s2] sm:$0xff]
  %v38 = vld [vmem:[%s2 + $0x8] sm:$0xff]
  %v39 = vld [vmem:[%s2 + $0x10] sm:$0xff]
  %v40 = vld [vmem:[%s2 + $0x18] sm:$0xff]
  %v41 = vld [vmem:[%s2 + $0x20] sm:$0xff]
  %v42 = vld [vmem:[%s2 + $0x28] sm:$0xff]
  %v43 = vld [vmem:[%s2 + $0x30] sm:$0xff]
  %v44 = vld [vmem:[%s2 + $0x38] sm:$0xff]
  %v45 = vld [vmem:[%s2 + $0x40] sm:$0xff]
  %v46 = vld [vmem:[%s2 + $0x48] sm:$0xff]
  %v47 = vld [vmem:[%s2 + $0x50] sm:$0xff]
  %v48 = vld [vmem:[%s2 + $0x58] sm:$0xff]
  %v49 = vld [vmem:[%s2 + $0x60] sm:$0xff]
  %v50 = vld [vmem:[%s2 + $0x68] sm:$0xff]
  %v51 = vld [vmem:[%s2 + $0x70] sm:$0xff]
  %v52 = vld [vmem:[%s2 + $0x78] sm:$0xff]
  %v53 = vld [vmem:[%s2 + $0x80] sm:$0xff]
  %v54 = vld [vmem:[%s2 + $0x88] sm:$0xff]
  %v55 = vld [vmem:[%s2 + $0x90] sm:$0xff]
  %v56 = vld [vmem:[%s2 + $0x98] sm:$0xff]
  %v57 = vld [vmem:[%s2 + $0xa0] sm:$0xff]
  %v58 = vld [vmem:[%s2 + $0xa8] sm:$0xff]
  %v59 = vld [vmem:[%s2 + $0xb0] sm:$0xff]
  %v60 = vld [vmem:[%s2 + $0xb8] sm:$0xff]
  %v61 = vld [vmem:[%s2 + $0xc0] sm:$0xff]
  %v62 = vld [vmem:[%s2 + $0xc8] sm:$0xff]
  %v63 = vld [vmem:[%s2 + $0xd0] sm:$0xff]
  %v64 = vld [vmem:[%s2 + $0xd8] sm:$0xff]
  %v65 = vld [vmem:[%s2 + $0xe0] sm:$0xff]
  %v66 = vld [vmem:[%s2 + $0xe8] sm:$0xff]
  %v67 = vld [vmem:[%s2 + $0xf0] sm:$0xff]
  %v68 = vld [vmem:[%s2 + $0xf8] sm:$0xff]
  %v69 = vld [vmem:[%s2 + $0x100] sm:$0xff]
  %v70 = vld [vmem:[%s2 + $0x108] sm:$0xff]
  %v71 = vld [vmem:[%s2 + $0x110] sm:$0xff]
  %v72 = vld [vmem:[%s2 + $0x118] sm:$0xff]
  %v73 = vld [vmem:[%s2 + $0x120] sm:$0xff]
  %v74 = vld [vmem:[%s2 + $0x128] sm:$0xff]
  %v75 = vld [vmem:[%s2 + $0x130] sm:$0xff]
  %v76 = vld [vmem:[%s2 + $0x138] sm:$0xff]
  %v77 = vld [vmem:[%s2 + $0x140] sm:$0xff]
  %v78 = vld [vmem:[%s2 + $0x148] sm:$0xff]
  %v79 = vld [vmem:[%s2 + $0x150] sm:$0xff]
  %v80 = vld [vmem:[%s2 + $0x158] sm:$0xff]
  %v81 = vld [vmem:[%s2 + $0x160] sm:$0xff]
  %v82 = vld [vmem:[%s2 + $0x168] sm:$0xff]
  %v83 = vld [vmem:[%s2 + $0x170] sm:$0xff]
  %v84 = vld [vmem:[%s2 + $0x178] sm:$0xff]
  %v85 = vld [vmem:[%s2 + $0x180] sm:$0xff]
  %v86 = vld [vmem:[%s2 + $0x188] sm:$0xff]
  %v87 = vld [vmem:[%s2 + $0x190] sm:$0xff]
  %v88 = vld [vmem:[%s2 + $0x198] sm:$0xff]
  %v89 = vld [vmem:[%s2 + $0x1a0] sm:$0xff]
  %v90 = vld [vmem:[%s2 + $0x1a8] sm:$0xff]
  %v91 = vld [vmem:[%s2 + $0x1b0] sm:$0xff]
  %v92 = vld [vmem:[%s2 + $0x1b8] sm:$0xff]
  %v93 = vld [vmem:[%s2 + $0x1c0] sm:$0xff]
  %v94 = vld [vmem:[%s2 + $0x1c8] sm:$0xff]
  %v95 = vld [vmem:[%s2 + $0x1d0] sm:$0xff]
  %v96 = vld [vmem:[%s2 + $0x1d8] sm:$0xff]
  %v97 = vld [vmem:[%s2 + $0x1e0] sm:$0xff]
  %v98 = vld [vmem:[%s2 + $0x1e8] sm:$0xff]
  %v99 = vld [vmem:[%s2 + $0x1f0] sm:$0xff]
  %v100 = vld [vmem:[%s2 + $0x1f8] sm:$0xff]
  %v101 = vld [vmem:[%s2 + $0x200] sm:$0xff]
  %v102 = vld [vmem:[%s2 + $0x208] sm:$0xff]
  %v103 = vld [vmem:[%s2 + $0x210] sm:$0xff]
  %v104 = vld [vmem:[%s2 + $0x218] sm:$0xff]
  %v105 = vld [vmem:[%s2 + $0x220] sm:$0xff]
  %v106 = vld [vmem:[%s2 + $0x228] sm:$0xff]
  %v107 = vld [vmem:[%s2 + $0x230] sm:$0xff]
  %v108 = vld [vmem:[%s2 + $0x238] sm:$0xff]
  %v109 = vld [vmem:[%s2 + $0x240] sm:$0xff]
  %v110 = vld [vmem:[%s2 + $0x248] sm:$0xff]
  %v111 = vld [vmem:[%s2 + $0x250] sm:$0xff]
  %v112 = vld [vmem:[%s2 + $0x258] sm:$0xff]
  %v113 = vld [vmem:[%s2 + $0x260] sm:$0xff]
  %v114 = vld [vmem:[%s2 + $0x268] sm:$0xff]
  %v115 = vld [vmem:[%s2 + $0x270] sm:$0xff]
  %v116 = vld [vmem:[%s2 + $0x278] sm:$0xff]
  %v117 = vld [vmem:[%s2 + $0x280] sm:$0xff]
  %v118 = vld [vmem:[%s2 + $0x288] sm:$0xff]
  %v119 = vld [vmem:[%s2 + $0x290] sm:$0xff]
  %v120 = vld [vmem:[%s2 + $0x298] sm:$0xff]
  %v121 = vld [vmem:[%s2 + $0x2a0] sm:$0xff]
  %v122 = vld [vmem:[%s2 + $0x2a8] sm:$0xff]
  %v123 = vld [vmem:[%s2 + $0x2b0] sm:$0xff]
  %v124 = vld [vmem:[%s2 + $0x2b8] sm:$0xff]
  %v125 = vld [vmem:[%s2 + $0x2c0] sm:$0xff]
  %v126 = vld [vmem:[%s2 + $0x2c8] sm:$0xff]
  %v127 = vld [vmem:[%s2 + $0x2d0] sm:$0xff]
  %v128 = vld [vmem:[%s2 + $0x2d8] sm:$0xff]
  %v129 = vld [vmem:[%s2 + $0x2e0] sm:$0xff]
  %v130 = vld [vmem:[%s2 + $0x2e8] sm:$0xff]
  %v131 = vld [vmem:[%s2 + $0x2f0] sm:$0xff]
  %v132 = vld [vmem:[%s2 + $0x2f8] sm:$0xff]
  %v133 = vld [vmem:[%s2 + $0x300] sm:$0xff]
  %v134 = vld [vmem:[%s2 + $0x308] sm:$0xff]
  %v135 = vld [vmem:[%s2 + $0x310] sm:$0xff]
  %v136 = vld [vmem:[%s2 + $0x318] sm:$0xff]
  %v137 = vld [vmem:[%s2 + $0x320] sm:$0xff]
  %v138 = vld [vmem:[%s2 + $0x328] sm:$0xff]
  %v139 = vld [vmem:[%s2 + $0x330] sm:$0xff]
  %v140 = vld [vmem:[%s2 + $0x338] sm:$0xff]
  %v141 = vld [vmem:[%s2 + $0x340] sm:$0xff]
  %v142 = vld [vmem:[%s2 + $0x348] sm:$0xff]
  %v143 = vld [vmem:[%s2 + $0x350] sm:$0xff]
  %v144 = vld [vmem:[%s2 + $0x358] sm:$0xff]
  %v145 = vld [vmem:[%s2 + $0x360] sm:$0xff]
  %v146 = vld [vmem:[%s2 + $0x368] sm:$0xff]
  %v147 = vld [vmem:[%s2 + $0x370] sm:$0xff]
  %v148 = vld [vmem:[%s2 + $0x378] sm:$0xff]
  %v149 = vld [vmem:[%s2 + $0x380] sm:$0xff]
  %v150 = vld [vmem:[%s2 + $0x388] sm:$0xff]
  %v151 = vld [vmem:[%s2 + $0x390] sm:$0xff]
  %v152 = vld [vmem:[%s2 + $0x398] sm:$0xff]
  %v153 = vld [vmem:[%s2 + $0x3a0] sm:$0xff]
  %v154 = vld [vmem:[%s2 + $0x3a8] sm:$0xff]
  %v155 = vld [vmem:[%s2 + $0x3b0] sm:$0xff]
  %v156 = vld [vmem:[%s2 + $0x3b8] sm:$0xff]
  %v157 = vld [vmem:[%s2 + $0x3c0] sm:$0xff]
  %v158 = vld [vmem:[%s2 + $0x3c8] sm:$0xff]
  %v159 = vld [vmem:[%s2 + $0x3d0] sm:$0xff]
  %v160 = vld [vmem:[%s2 + $0x3d8] sm:$0xff]
  %v161 = vld [vmem:[%s2 + $0x3e0] sm:$0xff]
  %v162 = vld [vmem:[%s2 + $0x3e8] sm:$0xff]
  %v163 = vld [vmem:[%s2 + $0x3f0] sm:$0xff]
  %v164 = vld [vmem:[%s2 + $0x3f8] sm:$0xff]
  %v165 = vld [vmem:[%s3] sm:$0x1]
  %v167 = vperm.slane %v165, 0
  %171 = vst [vmem:[#allocation1] ss:$4 sm:$0xff] %v35
  %s172 = scalar_lea.vmem [#allocation1], 32
  %173 = vst [vmem:[%s172] ss:$4 sm:$0xff] %v36
  %v174 = vld.sshfl [vmem:[#allocation1] sm:$0xff pattern:$0x73625140]
  %v175 = vld.sshfl [vmem:[#allocation1 + $0x8] sm:$0xff pattern:$0x73625140]
  %v176 = vld.sshfl [vmem:[#allocation1 + $0x10] sm:$0xff pattern:$0x73625140]
  %v177 = vld.sshfl [vmem:[#allocation1 + $0x18] sm:$0xff pattern:$0x73625140]
  %v178 = vld.sshfl [vmem:[#allocation1 + $0x20] sm:$0xff pattern:$0x73625140]
  %v179 = vld.sshfl [vmem:[#allocation1 + $0x28] sm:$0xff pattern:$0x73625140]
  %v180 = vld.sshfl [vmem:[#allocation1 + $0x30] sm:$0xff pattern:$0x73625140]
  %v181 = vld.sshfl [vmem:[#allocation1 + $0x38] sm:$0xff pattern:$0x73625140]
  %190 = vmatpush.msra.mxu0 %v52
  %191 = vmatpush.msra.mxu0 %v51
  %192 = vmatpush.msra.mxu0 %v50
  %193 = vmatpush.msra.mxu0 %v49
  %194 = vmatpush.msra.mxu0 %v48
  %195 = vmatpush.msra.mxu0 %v47
  %196 = vmatpush.msra.mxu0 %v46
  %197 = vmatpush.msra.mxu0 %v45
  %198 = vmatpush.msra.mxu0 %v44
  %199 = vmatpush.msra.mxu0 %v43
  %200 = vmatpush.msra.mxu0 %v42
  %201 = vmatpush.msra.mxu0 %v41
  %202 = vmatpush.msra.mxu0 %v40
  %203 = vmatpush.msra.mxu0 %v39
  %204 = vmatpush.msra.mxu0 %v38
  %205 = vmatpush.msra.mxu0 %v37
  %206 = vmatmul.f32.gmra.mxu0 %v174
  %v207 = vpop.f32.mrf.mxu0
  %v208 = vadd.f32 %v167, %v207
  %209 = vdwg.mxu0
  %210 = vmatpush.msra.mxu0 %v68
  %211 = vmatpush.msra.mxu0 %v67
  %212 = vmatpush.msra.mxu0 %v66
  %213 = vmatpush.msra.mxu0 %v65
  %214 = vmatpush.msra.mxu0 %v64
  %215 = vmatpush.msra.mxu0 %v63
  %216 = vmatpush.msra.mxu0 %v62
  %217 = vmatpush.msra.mxu0 %v61
  %218 = vmatpush.msra.mxu0 %v60
  %219 = vmatpush.msra.mxu0 %v59
  %220 = vmatpush.msra.mxu0 %v58
  %221 = vmatpush.msra.mxu0 %v57
  %222 = vmatpush.msra.mxu0 %v56
  %223 = vmatpush.msra.mxu0 %v55
  %224 = vmatpush.msra.mxu0 %v54
  %225 = vmatpush.msra.mxu0 %v53
  %226 = vmatmul.f32.gmra.mxu0 %v175
  %v227 = vpop.f32.mrf.mxu0
  %v228 = vadd.f32 %v208, %v227
  %229 = vdwg.mxu0
  %230 = vmatpush.msra.mxu0 %v84
  %231 = vmatpush.msra.mxu0 %v83
  %232 = vmatpush.msra.mxu0 %v82
  %233 = vmatpush.msra.mxu0 %v81
  %234 = vmatpush.msra.mxu0 %v80
  %235 = vmatpush.msra.mxu0 %v79
  %236 = vmatpush.msra.mxu0 %v78
  %237 = vmatpush.msra.mxu0 %v77
  %238 = vmatpush.msra.mxu0 %v76
  %239 = vmatpush.msra.mxu0 %v75
  %240 = vmatpush.msra.mxu0 %v74
  %241 = vmatpush.msra.mxu0 %v73
  %242 = vmatpush.msra.mxu0 %v72
  %243 = vmatpush.msra.mxu0 %v71
  %244 = vmatpush.msra.mxu0 %v70
  %245 = vmatpush.msra.mxu0 %v69
  %246 = vmatmul.f32.gmra.mxu0 %v176
  %v247 = vpop.f32.mrf.mxu0
  %v248 = vadd.f32 %v228, %v247
  %249 = vdwg.mxu0
  %250 = vmatpush.msra.mxu0 %v100
  %251 = vmatpush.msra.mxu0 %v99
  %252 = vmatpush.msra.mxu0 %v98
  %253 = vmatpush.msra.mxu0 %v97
  %254 = vmatpush.msra.mxu0 %v96
  %255 = vmatpush.msra.mxu0 %v95
  %256 = vmatpush.msra.mxu0 %v94
  %257 = vmatpush.msra.mxu0 %v93
  %258 = vmatpush.msra.mxu0 %v92
  %259 = vmatpush.msra.mxu0 %v91
  %260 = vmatpush.msra.mxu0 %v90
  %261 = vmatpush.msra.mxu0 %v89
  %262 = vmatpush.msra.mxu0 %v88
  %263 = vmatpush.msra.mxu0 %v87
  %264 = vmatpush.msra.mxu0 %v86
  %265 = vmatpush.msra.mxu0 %v85
  %266 = vmatmul.f32.gmra.mxu0 %v177
  %v267 = vpop.f32.mrf.mxu0
  %v268 = vadd.f32 %v248, %v267
  %269 = vdwg.mxu0
  %270 = vmatpush.msra.mxu0 %v116
  %271 = vmatpush.msra.mxu0 %v115
  %272 = vmatpush.msra.mxu0 %v114
  %273 = vmatpush.msra.mxu0 %v113
  %274 = vmatpush.msra.mxu0 %v112
  %275 = vmatpush.msra.mxu0 %v111
  %276 = vmatpush.msra.mxu0 %v110
  %277 = vmatpush.msra.mxu0 %v109
  %278 = vmatpush.msra.mxu0 %v108
  %279 = vmatpush.msra.mxu0 %v107
  %280 = vmatpush.msra.mxu0 %v106
  %281 = vmatpush.msra.mxu0 %v105
  %282 = vmatpush.msra.mxu0 %v104
  %283 = vmatpush.msra.mxu0 %v103
  %284 = vmatpush.msra.mxu0 %v102
  %285 = vmatpush.msra.mxu0 %v101
  %286 = vmatmul.f32.gmra.mxu0 %v178
  %v287 = vpop.f32.mrf.mxu0
  %v288 = vadd.f32 %v268, %v287
  %289 = vdwg.mxu0
  %290 = vmatpush.msra.mxu0 %v132
  %291 = vmatpush.msra.mxu0 %v131
  %292 = vmatpush.msra.mxu0 %v130
  %293 = vmatpush.msra.mxu0 %v129
  %294 = vmatpush.msra.mxu0 %v128
  %295 = vmatpush.msra.mxu0 %v127
  %296 = vmatpush.msra.mxu0 %v126
  %297 = vmatpush.msra.mxu0 %v125
  %298 = vmatpush.msra.mxu0 %v124
  %299 = vmatpush.msra.mxu0 %v123
  %300 = vmatpush.msra.mxu0 %v122
  %301 = vmatpush.msra.mxu0 %v121
  %302 = vmatpush.msra.mxu0 %v120
  %303 = vmatpush.msra.mxu0 %v119
  %304 = vmatpush.msra.mxu0 %v118
  %305 = vmatpush.msra.mxu0 %v117
  %306 = vmatmul.f32.gmra.mxu0 %v179
  %v307 = vpop.f32.mrf.mxu0
  %v308 = vadd.f32 %v288, %v307
  %309 = vdwg.mxu0
  %310 = vmatpush.msra.mxu0 %v148
  %311 = vmatpush.msra.mxu0 %v147
  %312 = vmatpush.msra.mxu0 %v146
  %313 = vmatpush.msra.mxu0 %v145
  %314 = vmatpush.msra.mxu0 %v144
  %315 = vmatpush.msra.mxu0 %v143
  %316 = vmatpush.msra.mxu0 %v142
  %317 = vmatpush.msra.mxu0 %v141
  %318 = vmatpush.msra.mxu0 %v140
  %319 = vmatpush.msra.mxu0 %v139
  %320 = vmatpush.msra.mxu0 %v138
  %321 = vmatpush.msra.mxu0 %v137
  %322 = vmatpush.msra.mxu0 %v136
  %323 = vmatpush.msra.mxu0 %v135
  %324 = vmatpush.msra.mxu0 %v134
  %325 = vmatpush.msra.mxu0 %v133
  %326 = vmatmul.f32.gmra.mxu0 %v180
  %v327 = vpop.f32.mrf.mxu0
  %v328 = vadd.f32 %v308, %v327
  %329 = vdwg.mxu0
  %330 = vmatpush.msra.mxu0 %v164
  %331 = vmatpush.msra.mxu0 %v163
  %332 = vmatpush.msra.mxu0 %v162
  %333 = vmatpush.msra.mxu0 %v161
  %334 = vmatpush.msra.mxu0 %v160
  %335 = vmatpush.msra.mxu0 %v159
  %336 = vmatpush.msra.mxu0 %v158
  %337 = vmatpush.msra.mxu0 %v157
  %338 = vmatpush.msra.mxu0 %v156
  %339 = vmatpush.msra.mxu0 %v155
  %340 = vmatpush.msra.mxu0 %v154
  %341 = vmatpush.msra.mxu0 %v153
  %342 = vmatpush.msra.mxu0 %v152
  %343 = vmatpush.msra.mxu0 %v151
  %344 = vmatpush.msra.mxu0 %v150
  %345 = vmatpush.msra.mxu0 %v149
  %346 = vmatmul.f32.gmra.mxu0 %v181
  %v347 = vpop.f32.mrf.mxu0
  %v348 = vadd.f32 %v328, %v347
  %349 = vdwg.mxu0
  %v350 = vxor.u32 %v348, 2147483648
  %v351 = vmul.f32 %v350, 1.442695
  %v352 = vpow.pop %v351
  %v353 = vadd.f32 %v352, 1.0
  %v354 = vrcp.pop %v353
  %v355 = vmul.f32 %v353, %v354
  %v356 = vsub.f32 1.0, %v355
  %v357 = vmul.f32 %v354, %v356
  %v358 = vadd.f32 %v354, %v357
  %vm359 = vweird.f32 %v353
  %vm360 = vweird.f32 %v354
  %vm361 = vmor %vm359, %vm360
  %v362 = vsel %vm361, %v354, %v358
  %v363 = vand.u32 2147483647, %v353
  %vm364 = vcmp.eq.f32.partialorder %v363, 8.507059e+37
  %v365 = vand.u32 %v353, 2147483648
  %v366 = vor.u32 1.1754944e-38, %v365
  %v367 = vsel %vm364, %v366, %v362
  %v368 = vmul.f32 1.0, %v367
  %v369 = vmul.f32 %v348, %v368
  %371 = vrot.lane.b32.xlu0 %v369, 124
  %v372 = vpop.permute.xlu0 %371
  %v374 = vadd.f32 %v369, %v372
  %375 = vrot.lane.b32.xlu0 %v369, 120
  %v376 = vpop.permute.xlu0 %375
  %v378 = vadd.f32 %v374, %v376
  %379 = vrot.lane.b32.xlu0 %v369, 116
  %v380 = vpop.permute.xlu0 %379
  %v382 = vadd.f32 %v378, %v380
  %v383 = vmul.f32 %v382, 0.25
  %v384 = vsub.f32 %v369, %v383
  %386 = vrot.lane.b32.xlu0 %v383, 4
  %v387 = vpop.permute.xlu0 %386
  %v389 = vsub.f32 %v369, %v387
  %390 = vrot.lane.b32.xlu0 %v383, 8
  %v391 = vpop.permute.xlu0 %390
  %v393 = vsub.f32 %v369, %v391
  %394 = vrot.lane.b32.xlu0 %v383, 12
  %v395 = vpop.permute.xlu0 %394
  %v397 = vsub.f32 %v369, %v395
  %v398 = vmul.f32 %v384, %v384
  %v399 = vmul.f32 %v389, %v389
  %401 = vrot.lane.b32.xlu0 %v399, 124
  %v402 = vpop.permute.xlu0 %401
  %v404 = vadd.f32 %v398, %v402
  %v405 = vmul.f32 %v393, %v393
  %407 = vrot.lane.b32.xlu0 %v405, 120
  %v408 = vpop.permute.xlu0 %407
  %v410 = vadd.f32 %v404, %v408
  %v411 = vmul.f32 %v397, %v397
  %413 = vrot.lane.b32.xlu0 %v411, 116
  %v414 = vpop.permute.xlu0 %413
  %v416 = vadd.f32 %v410, %v414
  %v417 = vmul.f32 %v416, 0.25
  %v418 = vadd.f32 %v417, 1e-05
  %v419 = vrsqrt.pop %v418
  %v420 = vmul.f32 %v419, %v418
  %v421 = vmul.f32 %v420, %v419
  %v422 = vmul.f32 0.5, %v421
  %v423 = vsub.f32 1.5, %v422
  %v424 = vmul.f32 %v419, %v423
  %vm425 = vweird.f32 %v418
  %vm426 = vweird.f32 %v419
  %vm427 = vmor %vm425, %vm426
  %v428 = vsel %vm427, %v419, %v424
  %v429 = vld [vmem:[%s1] sm:$0x3]
  %v430 = vld [vmem:[%s4] sm:$0xff]
  %v431 = vld [vmem:[%s5] sm:$0x1]
  %v433 = vperm.slane %v431, 0
  %vm435 = vcmask 64512
  %v437 = vsel %vm435, %v429, 0
  %439 = vmatpush.msra.mxu0 0.0
  %440 = vmatpush.msra.mxu0 0.0
  %441 = vmatpush.msra.mxu0 0.0
  %442 = vmatpush.msra.mxu0 0.0
  %443 = vmatpush.msra.mxu0 0.0
  %444 = vmatpush.msra.mxu0 0.0
  %445 = vmatpush.msra.mxu0 0.0
  %446 = vmatpush.msra.mxu0 0.0
  %447 = vmatpush.msra.mxu0 0.0
  %448 = vmatpush.msra.mxu0 0.0
  %449 = vmatpush.msra.mxu0 0.0
  %450 = vmatpush.msra.mxu0 0.0
  %451 = vmatpush.msra.mxu0 0.0
  %452 = vmatpush.msra.mxu0 0.0
  %453 = vmatpush.msra.mxu0 0.0
  %454 = vmatpush.msra.mxu0 %v430
  %455 = vmatmul.f32.gmra.mxu0 %v437
  %v456 = vpop.f32.mrf.mxu0
  %v457 = vadd.f32 %v433, %v456
  %458 = vdwg.mxu0
  %v459 = vld [vmem:[%s6] sm:$0xff]
  %v460 = vld [vmem:[%s7] sm:$0x1]
  %v462 = vperm.slane %v460, 0
  %464 = vmatpush.msra.mxu0 0.0
  %465 = vmatpush.msra.mxu0 0.0
  %466 = vmatpush.msra.mxu0 0.0
  %467 = vmatpush.msra.mxu0 0.0
  %468 = vmatpush.msra.mxu0 0.0
  %469 = vmatpush.msra.mxu0 0.0
  %470 = vmatpush.msra.mxu0 0.0
  %471 = vmatpush.msra.mxu0 0.0
  %472 = vmatpush.msra.mxu0 0.0
  %473 = vmatpush.msra.mxu0 0.0
  %474 = vmatpush.msra.mxu0 0.0
  %475 = vmatpush.msra.mxu0 0.0
  %476 = vmatpush.msra.mxu0 0.0
  %477 = vmatpush.msra.mxu0 0.0
  %478 = vmatpush.msra.mxu0 0.0
  %479 = vmatpush.msra.mxu0 %v459
  %480 = vmatmul.f32.gmra.mxu0 %v437
  %v481 = vpop.f32.mrf.mxu0
  %v482 = vadd.f32 %v462, %v481
  %483 = vdwg.mxu0
  %v484 = vmul.f32 %v384, %v428
  %v485 = vmul.f32 %v457, %v484
  %v486 = vadd.f32 %v485, %v482
  %488 = vrot.lane.b32.xlu0 %v428, 4
  %v489 = vpop.permute.xlu0 %488
  %v491 = vmul.f32 %v389, %v489
  %493 = vrot.lane.b32.xlu0 %v491, 124
  %v494 = vpop.permute.xlu0 %493
  %v496 = vmul.f32 %v457, %v494
  %v497 = vadd.f32 %v496, %v482
  %498 = vrot.lane.b32.xlu0 %v428, 8
  %v499 = vpop.permute.xlu0 %498
  %v501 = vmul.f32 %v393, %v499
  %503 = vrot.lane.b32.xlu0 %v501, 120
  %v504 = vpop.permute.xlu0 %503
  %v506 = vmul.f32 %v457, %v504
  %v507 = vadd.f32 %v506, %v482
  %508 = vrot.lane.b32.xlu0 %v428, 12
  %v509 = vpop.permute.xlu0 %508
  %v511 = vmul.f32 %v397, %v509
  %513 = vrot.lane.b32.xlu0 %v511, 116
  %v514 = vpop.permute.xlu0 %513
  %v516 = vmul.f32 %v457, %v514
  %v517 = vadd.f32 %v516, %v482
  %519 = vrot.lane.b32.xlu0 %v497, 4
  %v520 = vpop.permute.xlu0 %519
  %523 = vrot.lane.b32.xlu0 %v507, 8
  %v524 = vpop.permute.xlu0 %523
  %527 = vrot.lane.b32.xlu0 %v517, 12
  %v528 = vpop.permute.xlu0 %527
  %vm530 = vcmask 31744
  %v531 = vsel %vm530, %v486, %v520
  %v532 = vsel %vm435, %v531, %v524
  %vm533 = vcmask 97280
  %v534 = vsel %vm533, %v532, %v528
  %v535 = vld [vmem:[%s8] sm:$0xff]
  %v536 = vld [vmem:[%s8 + $0x8] sm:$0xff]
  %v537 = vld [vmem:[%s9] sm:$0x1]
  %v539 = vperm.slane %v537, 0
  %vm541 = vcmask 130048
  %v543 = vsel %vm541, %v534, 0
  %545 = vmatpush.msra.mxu0 0.0
  %546 = vmatpush.msra.mxu0 0.0
  %547 = vmatpush.msra.mxu0 0.0
  %548 = vmatpush.msra.mxu0 0.0
  %549 = vmatpush.msra.mxu0 0.0
  %550 = vmatpush.msra.mxu0 0.0
  %551 = vmatpush.msra.mxu0 0.0
  %552 = vmatpush.msra.mxu0 0.0
  %553 = vmatpush.msra.mxu0 0.0
  %554 = vmatpush.msra.mxu0 0.0
  %555 = vmatpush.msra.mxu0 0.0
  %556 = vmatpush.msra.mxu0 0.0
  %557 = vmatpush.msra.mxu0 0.0
  %558 = vmatpush.msra.mxu0 0.0
  %559 = vmatpush.msra.mxu0 %v536
  %560 = vmatpush.msra.mxu0 %v535
  %561 = vmatmul.f32.gmra.mxu0 %v543
  %v562 = vpop.f32.mrf.mxu0
  %v563 = vadd.f32 %v539, %v562
  %564 = vdwg.mxu0
  %v565 = vxor.u32 %v563, 2147483648
  %v566 = vmul.f32 %v565, 1.442695
  %v567 = vpow.pop %v566
  %v568 = vadd.f32 %v567, 1.0
  %v569 = vrcp.pop %v568
  %v570 = vmul.f32 %v568, %v569
  %v571 = vsub.f32 1.0, %v570
  %v572 = vmul.f32 %v569, %v571
  %v573 = vadd.f32 %v569, %v572
  %vm574 = vweird.f32 %v568
  %vm575 = vweird.f32 %v569
  %vm576 = vmor %vm574, %vm575
  %v577 = vsel %vm576, %v569, %v573
  %v578 = vand.u32 2147483647, %v568
  %vm579 = vcmp.eq.f32.partialorder %v578, 8.507059e+37
  %v580 = vand.u32 %v568, 2147483648
  %v581 = vor.u32 1.1754944e-38, %v580
  %v582 = vsel %vm579, %v581, %v577
  %v583 = vmul.f32 1.0, %v582
  %vm584 = vcmask 25600
  %585 = vst.msk [vmem:[%s10] sm:$0x3] %vm584, %v583
  // Predicated region
  $region42: #{se_block_cond.2} parent=0 // pred_check
    _
  $region43: #{se_block_cond.2} parent=0 // pred_check_branch
    %587 = sbr.rel (0) target = $region45
  $region44: #{se_block_cond.2} parent=0 // pred_region
    _
  $region45: #{se_block_cond.2} parent=0 // pred_fallthru
    _
  // Predicated region
  $region46: #{se_block_cond.2} parent=0 // pred_check
    _
  $region47: #{se_block_cond.2} parent=0 // pred_check_branch
    %589 = sbr.rel (0) target = $region49
  $region48: #{se_block_cond.2} parent=0 // pred_region
    _
  $region49: #{se_block_cond.2} parent=0 // pred_fallthru
    _

</llo_original>
